<compile_context>
chip_gen: v7x
topology: tpu7x:2x2x1
jax: 0.10.0
libtpu: 0.0.40
codegen_flags: <defaults>
</compile_context>

<pallas_src>
import functools

import jax
import jax.numpy as jnp
import numpy as np
from jax.experimental import pallas as pl
from jax.experimental.pallas import tpu as pltpu

LANES = 128      # lane width (last dim of a vreg)
SUBLANES = 8     # sublane count (second-to-last dim of a f32 vreg)


def _round_up(x, m):
    return ((x + m - 1) // m) * m


# --------------------------------------------------------------------------- #
# GAE kernel:   delta    = rew + gamma * v_s_  - v_s
#               discount = (1 - end_flag) * gamma * lambda
#               gae[t]   = delta[t] + discount[t] * gae[t+1]   (backward over T)
#               adv[t]   = gae[t]         ret[t] = gae[t] + v_s[t]   (fused)
#
# Grid = (B_tiles, T_tiles).  T-tiles iterate with a reversed index_map (latest
# time block first); the running gae per lane column is carried across T-tiles
# in a (1, B_blk) VMEM scratch, reset at program_id(1) == 0.
#
# Per 8-timestep block the recurrence is expressed as a composition of affine
# maps  y[r] = b[r] + a[r]*y[r+1]  and solved with a 3-stage Hillis-Steele
# suffix scan (rolls on the XLU), so the per-block serial VALU chain is
# 3 compose stages + 1 carry FMA instead of 8 serial FMAs.
# --------------------------------------------------------------------------- #
def _gae_kernel(v_s_ref, v_sp_ref, rew_ref, end_ref, adv_ref, ret_ref, gae_ref,
                *, gamma, gae_lambda):
    @pl.when(pl.program_id(1) == 0)
    def _():
        gae_ref[...] = jnp.zeros_like(gae_ref)

    tt, bb = adv_ref.shape
    n_blk = tt // SUBLANES
    gl = gamma * gae_lambda

    # hoisted constants for the segmented (8-row) suffix scan
    row = jax.lax.broadcasted_iota(jnp.int32, (SUBLANES, bb), 0)
    valid = [(row + s) < SUBLANES for s in (1, 2, 4)]

    def body(i, carry):
        # one 8-timestep block (one f32 vreg tall) per iteration, back to front
        t0 = pl.multiple_of((n_blk - 1 - i) * SUBLANES, SUBLANES)
        vs = v_s_ref[pl.ds(t0, SUBLANES), :]
        # affine map per row r:  gae[r] = b[r] + a[r] * gae[r+1]
        b = rew_ref[pl.ds(t0, SUBLANES), :] + v_sp_ref[pl.ds(t0, SUBLANES), :] * gamma - vs
        a = (1.0 - end_ref[pl.ds(t0, SUBLANES), :]) * gl
        # log-depth suffix composition within the 8 rows; rows shifted past the
        # block end take the identity map (a=1, b=0).
        for s, ok in zip((1, 2, 4), valid):
            a_sh = jnp.where(ok, pltpu.roll(a, SUBLANES - s, axis=0), 1.0)
            b_sh = jnp.where(ok, pltpu.roll(b, SUBLANES - s, axis=0), 0.0)
            b = b + a * b_sh
            a = a * a_sh
        # apply the carried gae from the later-time block: one serial FMA
        carry_new = b[0:1, :] + a[0:1, :] * carry
        blk = b + a * carry                          # (8, bb) broadcast along sublanes
        adv_ref[pl.ds(t0, SUBLANES), :] = blk        # unmasked full-vreg stores
        ret_ref[pl.ds(t0, SUBLANES), :] = blk + vs   # fused returns = adv + v_s
        return carry_new

    gae_ref[...] = jax.lax.fori_loop(0, n_blk, body, gae_ref[...], unroll=2)


def gae_return(v_s, v_s_, rew, end_flag, gamma, gae_lambda, *,
               time_tile=512, lane_tile=512):
    """Batched GAE.  rew / v_s_ / end_flag (and v_s if given) are (T,) or (T, B).
    Returns (returns, advantage) with the same leading shape, float32.
    If v_s is None it is derived as np.roll(v_s_, 1, axis=0) (the last value
    wraps to t=0, exactly like BasePolicy.compute_episodic_return)."""
    rew2 = jnp.asarray(rew, jnp.float32)
    squeeze = rew2.ndim == 1

    def to2d(x):
        x = jnp.asarray(x, jnp.float32)
        return x[:, None] if x.ndim == 1 else x

    rew2 = to2d(rew2)
    v_sp2 = to2d(v_s_)
    end2 = to2d(end_flag)
    v_s2 = None if v_s is None else to2d(v_s)
    T, B = rew2.shape

    # time tile: multiple of 8, bounded so the pipelined VMEM footprint
    # (6 streams x 2 bufs x TT x B_blk x 4B <= ~12 MiB) fits every generation.
    TT = _round_up(min(time_tile, _round_up(T, SUBLANES)), SUBLANES)
    T_pad = _round_up(T, TT)
    nT = T_pad // TT

    # batch (lane) tile: up to `lane_tile` lanes (4 f32 vregs) to fill the VALU
    # issue width, but keep >= 2 B-tiles when possible (v7x megacore sharding).
    max_gpb = max(1, lane_tile // LANES)
    n128 = _round_up(B, LANES) // LANES
    if n128 >= 2 * max_gpb:
        gpb = max_gpb
    elif n128 >= 2:
        gpb = max(1, min(max_gpb, n128 // 2))
    else:
        gpb = 1
    B_blk = gpb * LANES
    B_pad = _round_up(B, B_blk)
    nB = B_pad // B_blk

    aligned = (T_pad == T) and (B_pad == B)

    # NOTE: pad fill values are load-bearing -- padded cells must have end=1 and
    # rew=v_s=v_s_=0 so that delta=0 and discount=0 and the carried gae stays
    # exact across the pad/real boundary.
    def pad(x, fill):
        if aligned:
            return x
        return jnp.full((T_pad, B_pad), fill, jnp.float32).at[:T, :B].set(x)

    v_sp_p = pad(v_sp2, 0.0)
    rew_p = pad(rew2, 0.0)
    end_p = pad(end2, 1.0)
    if v_s2 is None:
        # fused roll+pad: one HBM pass, np.roll(v_s_, 1, axis=0) semantics
        if aligned:
            v_s_p = jnp.roll(v_sp2, 1, axis=0)
        else:
            v_s_p = (jnp.zeros((T_pad, B_pad), jnp.float32)
                     .at[1:T, :B].set(v_sp2[:T - 1])
                     .at[0, :B].set(v_sp2[T - 1]))
    else:
        v_s_p = pad(v_s2, 0.0)

    def t_rev_map(b, t):                 # reversed time order: latest block first
        return (nT - 1 - t, b)

    spec = pl.BlockSpec((TT, B_blk), t_rev_map)
    kernel = functools.partial(_gae_kernel, gamma=float(gamma),
                               gae_lambda=float(gae_lambda))

    adv_p, ret_p = pl.pallas_call(
        kernel,
        out_shape=(jax.ShapeDtypeStruct((T_pad, B_pad), jnp.float32),
                   jax.ShapeDtypeStruct((T_pad, B_pad), jnp.float32)),
        grid=(nB, nT),
        in_specs=[spec, spec, spec, spec],
        out_specs=[spec, spec],
        scratch_shapes=[pltpu.VMEM((1, B_blk), jnp.float32)],
        compiler_params=pltpu.CompilerParams(
            dimension_semantics=("parallel", "arbitrary")),
    )(v_s_p, v_sp_p, rew_p, end_p)

    ret = ret_p[:T, :B]
    adv = adv_p[:T, :B]
    if squeeze:
        ret, adv = ret[:, 0], adv[:, 0]
    return ret, adv


# --------------------------------------------------------------------------- #
# map_action kernel: bound (clip / tanh) + fused affine rescale  a*scale + bias
# Natural (B, A) layout: action dim lane-padded to 128, batch tiled on sublanes.
# --------------------------------------------------------------------------- #
def _map_action_kernel(act_ref, scale_ref, bias_ref, out_ref, *,
                       bound_method, action_scaling):
    a = act_ref[...]
    if bound_method == "clip":
        a = jnp.clip(a, -1.0, 1.0)
    elif bound_method == "tanh":
        a = jnp.tanh(a)
    if action_scaling:
        # scale/bias are a single (1, A_pad) row, broadcast across sublanes
        a = a * scale_ref[...] + bias_ref[...]
    out_ref[...] = a


def map_action_pallas(act, low, high, bound_method, action_scaling, *,
                      batch_tile=256):
    act = jnp.asarray(act, jnp.float32)
    squeeze = act.ndim == 1
    if squeeze:
        act = act[None, :]
    B, A = act.shape

    A_pad = _round_up(A, LANES)
    TB = _round_up(min(batch_tile, _round_up(B, SUBLANES)), SUBLANES)
    B_pad = _round_up(B, TB)

    if A_pad == A and B_pad == B:
        act_p = act
    else:
        act_p = jnp.zeros((B_pad, A_pad), jnp.float32).at[:B, :A].set(act)

    low = jnp.asarray(low, jnp.float32).reshape(-1)
    high = jnp.asarray(high, jnp.float32).reshape(-1)
    # low + (high - low) * (a + 1) / 2  ==  a * scale + bias
    scale = jnp.zeros((1, A_pad), jnp.float32).at[0, :A].set((high - low) * 0.5)
    bias = jnp.zeros((1, A_pad), jnp.float32).at[0, :A].set((high + low) * 0.5)

    kernel = functools.partial(_map_action_kernel, bound_method=bound_method,
                               action_scaling=action_scaling)
    out = pl.pallas_call(
        kernel,
        out_shape=jax.ShapeDtypeStruct((B_pad, A_pad), jnp.float32),
        grid=(B_pad // TB,),
        in_specs=[pl.BlockSpec((TB, A_pad), lambda b: (b, 0)),
                  pl.BlockSpec((1, A_pad), lambda b: (0, 0)),
                  pl.BlockSpec((1, A_pad), lambda b: (0, 0))],
        out_specs=pl.BlockSpec((TB, A_pad), lambda b: (b, 0)),
        compiler_params=pltpu.CompilerParams(dimension_semantics=("parallel",)),
    )(act_p, scale, bias)

    res = out[:B, :A]
    return res[0] if squeeze else res


def map_action_xla(act, low, high, bound_method, action_scaling):
    """Plain-XLA path for small batches (kernel launch/pad overhead dominates)."""
    a = jnp.asarray(act, jnp.float32)
    if bound_method == "clip":
        a = jnp.clip(a, -1.0, 1.0)
    elif bound_method == "tanh":
        a = jnp.tanh(a)
    if action_scaling:
        low = jnp.asarray(low, jnp.float32)
        high = jnp.asarray(high, jnp.float32)
        a = low + (high - low) * (a + 1.0) * 0.5
    return a


# --------------------------------------------------------------------------- #
# Thin "BasePolicy" wrapper (config only -- the module has no trainable weights).
# --------------------------------------------------------------------------- #
class BasePolicyPallas:
    _PALLAS_MIN_ELEMS = 1 << 16   # below this, XLA fuses the elementwise chain fine

    def __init__(self, *, action_low, action_high, action_scaling=True,
                 action_bound_method="clip", gamma=0.99, gae_lambda=0.95):
        assert action_bound_method in ("clip", "tanh", None)
        self.action_low = jnp.asarray(action_low, jnp.float32)
        self.action_high = jnp.asarray(action_high, jnp.float32)
        self.action_scaling = action_scaling
        self.action_bound_method = action_bound_method
        self.gamma = gamma
        self.gae_lambda = gae_lambda

    def compute_episodic_return(self, rew, v_s_, end_flag, v_s=None):
        """Returns (returns, advantage); mirrors BasePolicy.compute_episodic_return.
        Buffer value-masking / unfinished-index handling is caller-side glue.
        NOTE: when v_s is None it is np.roll(v_s_, 1, axis=0) -- the last value
        wraps to t=0 and the caller is expected to mask it, as in tianshou."""
        return gae_return(v_s, v_s_, rew, end_flag, self.gamma, self.gae_lambda)

    def map_action(self, act):
        act = jnp.asarray(act, jnp.float32)
        if act.size < self._PALLAS_MIN_ELEMS:
            return map_action_xla(act, self.action_low, self.action_high,
                                  self.action_bound_method, self.action_scaling)
        return map_action_pallas(act, self.action_low, self.action_high,
                                 self.action_bound_method, self.action_scaling)

    # TODO(synk): _nstep_return needs data-dependent replay-buffer index gathers
    # (rew[indices[n]], end_flag[indices[n]]); that requires scalar-prefetch /
    # DMA gather and is not faked here.


# --------------------------------------------------------------------------- #
# Pure-numpy references (transcription of the @njit reference code).
# --------------------------------------------------------------------------- #
def _gae_return_ref(v_s, v_s_, rew, end_flag, gamma, gae_lambda):
    returns = np.zeros(rew.shape)
    delta = rew + v_s_ * gamma - v_s
    discount = (1.0 - end_flag) * (gamma * gae_lambda)
    gae = 0.0
    for i in range(len(rew) - 1, -1, -1):
        gae = delta[i] + discount[i] * gae
        returns[i] = gae
    return returns


def _map_action_ref(act, low, high):
    act = np.clip(act, -1.0, 1.0)
    return low + (high - low) * (act + 1.0) / 2.0


if __name__ == "__main__":
    key = jax.random.PRNGKey(0)
    NA = 8
    low = -1.0 - jnp.arange(NA, dtype=jnp.float32) * 0.1
    high = 1.0 + jnp.arange(NA, dtype=jnp.float32) * 0.25
    policy = BasePolicyPallas(action_low=low, action_high=high,
                              action_scaling=True, action_bound_method="clip",
                              gamma=0.99, gae_lambda=0.95)

    def check_gae(T, B, subkey):
        k1, k2, k3 = jax.random.split(subkey, 3)
        rew = jax.random.normal(k1, (T, B), jnp.float32)
        v_s_ = jax.random.normal(k2, (T, B), jnp.float32)
        end = (jax.random.uniform(k3, (T, B)) < 0.2).astype(jnp.float32)
        returns, advantage = policy.compute_episodic_return(rew, v_s_, end)
        jax.block_until_ready((returns, advantage))
        rew_np, vsp_np, end_np = np.asarray(rew), np.asarray(v_s_), np.asarray(end)
        vs_np = np.roll(vsp_np, 1, axis=0)
        adv_ref = np.stack(
            [_gae_return_ref(vs_np[:, b], vsp_np[:, b], rew_np[:, b], end_np[:, b],
                             0.99, 0.95) for b in range(B)], axis=1)
        np.testing.assert_allclose(np.asarray(advantage), adv_ref,
                                   rtol=1e-5, atol=1e-5)
        np.testing.assert_allclose(np.asarray(returns), adv_ref + vs_np,
                                   rtol=1e-5, atol=1e-5)

    k_a, k_b, k_c = jax.random.split(key, 3)
    check_gae(16, 8, k_a)      # small aligned-T case
    check_gae(50, 5, k_b)      # exercises T/B padding + odd block count + unroll tail

    # map_action: forced Pallas path, small-batch XLA path, and tanh bounding
    act = 2.0 * jax.random.normal(k_c, (2, NA), jnp.float32)
    mapped_pl = map_action_pallas(act, low, high, "clip", True)
    mapped_xla = policy.map_action(act)            # tiny input -> XLA fast path
    mapped_tanh = map_action_pallas(act, low, high, "tanh", False)
    jax.block_until_ready((mapped_pl, mapped_xla, mapped_tanh))

    ref = _map_action_ref(np.asarray(act), np.asarray(low), np.asarray(high))
    np.testing.assert_allclose(np.asarray(mapped_pl), ref, rtol=1e-6, atol=1e-6)
    np.testing.assert_allclose(np.asarray(mapped_xla), ref, rtol=1e-6, atol=1e-6)
    np.testing.assert_allclose(np.asarray(mapped_tanh), np.tanh(np.asarray(act)),
                               rtol=1e-6, atol=1e-6)

    print("KERNEL_OK")
</pallas_src>

<mosaic_0001>
module attributes {stable_mosaic.version = 11 : i64} {
  func.func @_gae_kernel(%arg0: i32, %arg1: i32, %arg2: memref<16x128xf32, #tpu.memory_space<vmem>>, %arg3: memref<16x128xf32, #tpu.memory_space<vmem>>, %arg4: memref<16x128xf32, #tpu.memory_space<vmem>>, %arg5: memref<16x128xf32, #tpu.memory_space<vmem>>, %arg6: memref<16x128xf32, #tpu.memory_space<vmem>>, %arg7: memref<16x128xf32, #tpu.memory_space<vmem>>, %arg8: memref<1x128xf32, #tpu.memory_space<vmem>>) attributes {dimension_semantics = [#tpu.dimension_semantics<parallel>, #tpu.dimension_semantics<arbitrary>], iteration_bounds = array<i64: 1, 1>, scalar_prefetch = 0 : i64, scratch_operands = 1 : i64, tpu.core_type = #tpu.core_type<tc>, window_params = [{transform_indices = @transform_0, window_bounds = array<i64: 16, 128>}, {transform_indices = @transform_1, window_bounds = array<i64: 16, 128>}, {transform_indices = @transform_2, window_bounds = array<i64: 16, 128>}, {transform_indices = @transform_3, window_bounds = array<i64: 16, 128>}, {transform_indices = @transform_4, window_bounds = array<i64: 16, 128>}, {transform_indices = @transform_5, window_bounds = array<i64: 16, 128>}]} {
    %c0_i32 = arith.constant 0 : i32
    %0 = arith.cmpi eq, %arg1, %c0_i32 : i32
    %1 = arith.extui %0 : i1 to i32
    %c0_i32_0 = arith.constant 0 : i32
    %2 = arith.cmpi ne, %1, %c0_i32_0 : i32
    scf.if %2 {
      %cst_52 = arith.constant 0.000000e+00 : f32
      %134 = vector.broadcast %cst_52 : f32 to vector<1x128xf32>
      %c0_53 = arith.constant 0 : index
      %c0_54 = arith.constant 0 : index
      %135 = vector.load %arg8[%c0_53, %c0_54] : memref<1x128xf32, #tpu.memory_space<vmem>>, vector<1x128xf32>
      tpu.vector_store %arg8[%c0_53, %c0_54], %134 {strides = array<i32>} : memref<1x128xf32, #tpu.memory_space<vmem>>, vector<1x128xf32>,
    } else {
    }
    %3 = tpu.iota {dimensions = array<i32: 0>} : vector<8x128xi32>
    %c1_i32 = arith.constant 1 : i32
    %4 = vector.broadcast %c1_i32 : i32 to vector<8x128xi32>
    %5 = arith.addi %3, %4 : vector<8x128xi32>
    %c8_i32 = arith.constant 8 : i32
    %6 = vector.broadcast %c8_i32 : i32 to vector<8x128xi32>
    %7 = arith.cmpi slt, %5, %6 : vector<8x128xi32>
    %c2_i32 = arith.constant 2 : i32
    %8 = vector.broadcast %c2_i32 : i32 to vector<8x128xi32>
    %9 = arith.addi %3, %8 : vector<8x128xi32>
    %c8_i32_1 = arith.constant 8 : i32
    %10 = vector.broadcast %c8_i32_1 : i32 to vector<8x128xi32>
    %11 = arith.cmpi slt, %9, %10 : vector<8x128xi32>
    %c4_i32 = arith.constant 4 : i32
    %12 = vector.broadcast %c4_i32 : i32 to vector<8x128xi32>
    %13 = arith.addi %3, %12 : vector<8x128xi32>
    %c8_i32_2 = arith.constant 8 : i32
    %14 = vector.broadcast %c8_i32_2 : i32 to vector<8x128xi32>
    %15 = arith.cmpi slt, %13, %14 : vector<8x128xi32>
    %c0 = arith.constant 0 : index
    %c0_3 = arith.constant 0 : index
    %16 = vector.load %arg8[%c0, %c0_3] : memref<1x128xf32, #tpu.memory_space<vmem>>, vector<1x128xf32>
    %c0_i32_4 = arith.constant 0 : i32
    %c1_i32_5 = arith.constant 1 : i32
    %17 = arith.subi %c1_i32_5, %c0_i32_4 : i32
    %c8_i32_6 = arith.constant 8 : i32
    %18 = arith.muli %17, %c8_i32_6 : i32
    %19 = tpu.assume_multiple %18, 8 : i32
    %20 = arith.index_cast %19 : i32 to index
    %c0_7 = arith.constant 0 : index
    %21 = vector.load %arg2[%20, %c0_7] : memref<16x128xf32, #tpu.memory_space<vmem>>, vector<8x128xf32>
    %22 = arith.index_cast %19 : i32 to index
    %c0_8 = arith.constant 0 : index
    %23 = vector.load %arg4[%22, %c0_8] : memref<16x128xf32, #tpu.memory_space<vmem>>, vector<8x128xf32>
    %24 = arith.index_cast %19 : i32 to index
    %c0_9 = arith.constant 0 : index
    %25 = vector.load %arg3[%24, %c0_9] : memref<16x128xf32, #tpu.memory_space<vmem>>, vector<8x128xf32>
    %cst = arith.constant 9.900000e-01 : f32
    %26 = vector.broadcast %cst : f32 to vector<8x128xf32>
    %27 = arith.mulf %25, %26 : vector<8x128xf32>
    %28 = arith.addf %23, %27 : vector<8x128xf32>
    %29 = arith.subf %28, %21 : vector<8x128xf32>
    %30 = arith.index_cast %19 : i32 to index
    %c0_10 = arith.constant 0 : index
    %31 = vector.load %arg5[%30, %c0_10] : memref<16x128xf32, #tpu.memory_space<vmem>>, vector<8x128xf32>
    %cst_11 = arith.constant 1.000000e+00 : f32
    %32 = vector.broadcast %cst_11 : f32 to vector<8x128xf32>
    %33 = arith.subf %32, %31 : vector<8x128xf32>
    %cst_12 = arith.constant 9.405000e-01 : f32
    %34 = vector.broadcast %cst_12 : f32 to vector<8x128xf32>
    %35 = arith.mulf %33, %34 : vector<8x128xf32>
    %c7_i32 = arith.constant 7 : i32
    %36 = tpu.dynamic_rotate %35 by %c7_i32 dim 0 : vector<8x128xf32>, i32 -> vector<8x128xf32>
    %cst_13 = arith.constant 1.000000e+00 : f32
    %37 = vector.broadcast %cst_13 : f32 to vector<8x128xf32>
    %38 = arith.select %7, %36, %37 : vector<8x128xi1>, vector<8x128xf32>
    %c7_i32_14 = arith.constant 7 : i32
    %39 = tpu.dynamic_rotate %29 by %c7_i32_14 dim 0 : vector<8x128xf32>, i32 -> vector<8x128xf32>
    %cst_15 = arith.constant 0.000000e+00 : f32
    %40 = vector.broadcast %cst_15 : f32 to vector<8x128xf32>
    %41 = arith.select %7, %39, %40 : vector<8x128xi1>, vector<8x128xf32>
    %42 = arith.mulf %35, %41 : vector<8x128xf32>
    %43 = arith.addf %29, %42 : vector<8x128xf32>
    %44 = arith.mulf %35, %38 : vector<8x128xf32>
    %c6_i32 = arith.constant 6 : i32
    %45 = tpu.dynamic_rotate %44 by %c6_i32 dim 0 : vector<8x128xf32>, i32 -> vector<8x128xf32>
    %cst_16 = arith.constant 1.000000e+00 : f32
    %46 = vector.broadcast %cst_16 : f32 to vector<8x128xf32>
    %47 = arith.select %11, %45, %46 : vector<8x128xi1>, vector<8x128xf32>
    %c6_i32_17 = arith.constant 6 : i32
    %48 = tpu.dynamic_rotate %43 by %c6_i32_17 dim 0 : vector<8x128xf32>, i32 -> vector<8x128xf32>
    %cst_18 = arith.constant 0.000000e+00 : f32
    %49 = vector.broadcast %cst_18 : f32 to vector<8x128xf32>
    %50 = arith.select %11, %48, %49 : vector<8x128xi1>, vector<8x128xf32>
    %51 = arith.mulf %44, %50 : vector<8x128xf32>
    %52 = arith.addf %43, %51 : vector<8x128xf32>
    %53 = arith.mulf %44, %47 : vector<8x128xf32>
    %c4_i32_19 = arith.constant 4 : i32
    %54 = tpu.dynamic_rotate %53 by %c4_i32_19 dim 0 : vector<8x128xf32>, i32 -> vector<8x128xf32>
    %cst_20 = arith.constant 1.000000e+00 : f32
    %55 = vector.broadcast %cst_20 : f32 to vector<8x128xf32>
    %56 = arith.select %15, %54, %55 : vector<8x128xi1>, vector<8x128xf32>
    %c4_i32_21 = arith.constant 4 : i32
    %57 = tpu.dynamic_rotate %52 by %c4_i32_21 dim 0 : vector<8x128xf32>, i32 -> vector<8x128xf32>
    %cst_22 = arith.constant 0.000000e+00 : f32
    %58 = vector.broadcast %cst_22 : f32 to vector<8x128xf32>
    %59 = arith.select %15, %57, %58 : vector<8x128xi1>, vector<8x128xf32>
    %60 = arith.mulf %53, %59 : vector<8x128xf32>
    %61 = arith.addf %52, %60 : vector<8x128xf32>
    %62 = arith.mulf %53, %56 : vector<8x128xf32>
    %63 = vector.extract_strided_slice %61 {offsets = [0, 0], sizes = [1, 128], strides = [1, 1]} : vector<8x128xf32> to vector<1x128xf32>
    %64 = vector.extract_strided_slice %62 {offsets = [0, 0], sizes = [1, 128], strides = [1, 1]} : vector<8x128xf32> to vector<1x128xf32>
    %65 = arith.mulf %64, %16 : vector<1x128xf32>
    %66 = arith.addf %63, %65 : vector<1x128xf32>
    %67 = vector.broadcast %16 : vector<1x128xf32> to vector<8x128xf32>
    %68 = arith.mulf %62, %67 : vector<8x128xf32>
    %69 = arith.addf %61, %68 : vector<8x128xf32>
    %70 = arith.index_cast %19 : i32 to index
    %c0_23 = arith.constant 0 : index
    %71 = vector.load %arg6[%70, %c0_23] : memref<16x128xf32, #tpu.memory_space<vmem>>, vector<8x128xf32>
    tpu.vector_store %arg6[%70, %c0_23], %69 {strides = array<i32>} : memref<16x128xf32, #tpu.memory_space<vmem>>, vector<8x128xf32>,
    %72 = arith.addf %69, %21 : vector<8x128xf32>
    %73 = arith.index_cast %19 : i32 to index
    %c0_24 = arith.constant 0 : index
    %74 = vector.load %arg7[%73, %c0_24] : memref<16x128xf32, #tpu.memory_space<vmem>>, vector<8x128xf32>
    tpu.vector_store %arg7[%73, %c0_24], %72 {strides = array<i32>} : memref<16x128xf32, #tpu.memory_space<vmem>>, vector<8x128xf32>,
    %c1_i32_25 = arith.constant 1 : i32
    %c1_i32_26 = arith.constant 1 : i32
    %75 = arith.subi %c1_i32_26, %c1_i32_25 : i32
    %c8_i32_27 = arith.constant 8 : i32
    %76 = arith.muli %75, %c8_i32_27 : i32
    %77 = tpu.assume_multiple %76, 8 : i32
    %78 = arith.index_cast %77 : i32 to index
    %c0_28 = arith.constant 0 : index
    %79 = vector.load %arg2[%78, %c0_28] : memref<16x128xf32, #tpu.memory_space<vmem>>, vector<8x128xf32>
    %80 = arith.index_cast %77 : i32 to index
    %c0_29 = arith.constant 0 : index
    %81 = vector.load %arg4[%80, %c0_29] : memref<16x128xf32, #tpu.memory_space<vmem>>, vector<8x128xf32>
    %82 = arith.index_cast %77 : i32 to index
    %c0_30 = arith.constant 0 : index
    %83 = vector.load %arg3[%82, %c0_30] : memref<16x128xf32, #tpu.memory_space<vmem>>, vector<8x128xf32>
    %cst_31 = arith.constant 9.900000e-01 : f32
    %84 = vector.broadcast %cst_31 : f32 to vector<8x128xf32>
    %85 = arith.mulf %83, %84 : vector<8x128xf32>
    %86 = arith.addf %81, %85 : vector<8x128xf32>
    %87 = arith.subf %86, %79 : vector<8x128xf32>
    %88 = arith.index_cast %77 : i32 to index
    %c0_32 = arith.constant 0 : index
    %89 = vector.load %arg5[%88, %c0_32] : memref<16x128xf32, #tpu.memory_space<vmem>>, vector<8x128xf32>
    %cst_33 = arith.constant 1.000000e+00 : f32
    %90 = vector.broadcast %cst_33 : f32 to vector<8x128xf32>
    %91 = arith.subf %90, %89 : vector<8x128xf32>
    %cst_34 = arith.constant 9.405000e-01 : f32
    %92 = vector.broadcast %cst_34 : f32 to vector<8x128xf32>
    %93 = arith.mulf %91, %92 : vector<8x128xf32>
    %c7_i32_35 = arith.constant 7 : i32
    %94 = tpu.dynamic_rotate %93 by %c7_i32_35 dim 0 : vector<8x128xf32>, i32 -> vector<8x128xf32>
    %cst_36 = arith.constant 1.000000e+00 : f32
    %95 = vector.broadcast %cst_36 : f32 to vector<8x128xf32>
    %96 = arith.select %7, %94, %95 : vector<8x128xi1>, vector<8x128xf32>
    %c7_i32_37 = arith.constant 7 : i32
    %97 = tpu.dynamic_rotate %87 by %c7_i32_37 dim 0 : vector<8x128xf32>, i32 -> vector<8x128xf32>
    %cst_38 = arith.constant 0.000000e+00 : f32
    %98 = vector.broadcast %cst_38 : f32 to vector<8x128xf32>
    %99 = arith.select %7, %97, %98 : vector<8x128xi1>, vector<8x128xf32>
    %100 = arith.mulf %93, %99 : vector<8x128xf32>
    %101 = arith.addf %87, %100 : vector<8x128xf32>
    %102 = arith.mulf %93, %96 : vector<8x128xf32>
    %c6_i32_39 = arith.constant 6 : i32
    %103 = tpu.dynamic_rotate %102 by %c6_i32_39 dim 0 : vector<8x128xf32>, i32 -> vector<8x128xf32>
    %cst_40 = arith.constant 1.000000e+00 : f32
    %104 = vector.broadcast %cst_40 : f32 to vector<8x128xf32>
    %105 = arith.select %11, %103, %104 : vector<8x128xi1>, vector<8x128xf32>
    %c6_i32_41 = arith.constant 6 : i32
    %106 = tpu.dynamic_rotate %101 by %c6_i32_41 dim 0 : vector<8x128xf32>, i32 -> vector<8x128xf32>
    %cst_42 = arith.constant 0.000000e+00 : f32
    %107 = vector.broadcast %cst_42 : f32 to vector<8x128xf32>
    %108 = arith.select %11, %106, %107 : vector<8x128xi1>, vector<8x128xf32>
    %109 = arith.mulf %102, %108 : vector<8x128xf32>
    %110 = arith.addf %101, %109 : vector<8x128xf32>
    %111 = arith.mulf %102, %105 : vector<8x128xf32>
    %c4_i32_43 = arith.constant 4 : i32
    %112 = tpu.dynamic_rotate %111 by %c4_i32_43 dim 0 : vector<8x128xf32>, i32 -> vector<8x128xf32>
    %cst_44 = arith.constant 1.000000e+00 : f32
    %113 = vector.broadcast %cst_44 : f32 to vector<8x128xf32>
    %114 = arith.select %15, %112, %113 : vector<8x128xi1>, vector<8x128xf32>
    %c4_i32_45 = arith.constant 4 : i32
    %115 = tpu.dynamic_rotate %110 by %c4_i32_45 dim 0 : vector<8x128xf32>, i32 -> vector<8x128xf32>
    %cst_46 = arith.constant 0.000000e+00 : f32
    %116 = vector.broadcast %cst_46 : f32 to vector<8x128xf32>
    %117 = arith.select %15, %115, %116 : vector<8x128xi1>, vector<8x128xf32>
    %118 = arith.mulf %111, %117 : vector<8x128xf32>
    %119 = arith.addf %110, %118 : vector<8x128xf32>
    %120 = arith.mulf %111, %114 : vector<8x128xf32>
    %121 = vector.extract_strided_slice %119 {offsets = [0, 0], sizes = [1, 128], strides = [1, 1]} : vector<8x128xf32> to vector<1x128xf32>
    %122 = vector.extract_strided_slice %120 {offsets = [0, 0], sizes = [1, 128], strides = [1, 1]} : vector<8x128xf32> to vector<1x128xf32>
    %123 = arith.mulf %122, %66 : vector<1x128xf32>
    %124 = arith.addf %121, %123 : vector<1x128xf32>
    %125 = vector.broadcast %66 : vector<1x128xf32> to vector<8x128xf32>
    %126 = arith.mulf %120, %125 : vector<8x128xf32>
    %127 = arith.addf %119, %126 : vector<8x128xf32>
    %128 = arith.index_cast %77 : i32 to index
    %c0_47 = arith.constant 0 : index
    %129 = vector.load %arg6[%128, %c0_47] : memref<16x128xf32, #tpu.memory_space<vmem>>, vector<8x128xf32>
    tpu.vector_store %arg6[%128, %c0_47], %127 {strides = array<i32>} : memref<16x128xf32, #tpu.memory_space<vmem>>, vector<8x128xf32>,
    %130 = arith.addf %127, %79 : vector<8x128xf32>
    %131 = arith.index_cast %77 : i32 to index
    %c0_48 = arith.constant 0 : index
    %132 = vector.load %arg7[%131, %c0_48] : memref<16x128xf32, #tpu.memory_space<vmem>>, vector<8x128xf32>
    tpu.vector_store %arg7[%131, %c0_48], %130 {strides = array<i32>} : memref<16x128xf32, #tpu.memory_space<vmem>>, vector<8x128xf32>,
    %c2_i32_49 = arith.constant 2 : i32
    %c0_50 = arith.constant 0 : index
    %c0_51 = arith.constant 0 : index
    %133 = vector.load %arg8[%c0_50, %c0_51] : memref<1x128xf32, #tpu.memory_space<vmem>>, vector<1x128xf32>
    tpu.vector_store %arg8[%c0_50, %c0_51], %124 {strides = array<i32>} : memref<1x128xf32, #tpu.memory_space<vmem>>, vector<1x128xf32>,
    return
  }
  func.func @transform_0(%arg0: i32, %arg1: i32) -> (i32, i32) {
    %c0_i32 = arith.constant 0 : i32
    %0 = arith.subi %c0_i32, %arg1 : i32
    %c0_i32_0 = arith.constant 0 : i32
    return %0, %arg0 : i32, i32
  }
  func.func @transform_1(%arg0: i32, %arg1: i32) -> (i32, i32) {
    %c0_i32 = arith.constant 0 : i32
    %0 = arith.subi %c0_i32, %arg1 : i32
    %c0_i32_0 = arith.constant 0 : i32
    return %0, %arg0 : i32, i32
  }
  func.func @transform_2(%arg0: i32, %arg1: i32) -> (i32, i32) {
    %c0_i32 = arith.constant 0 : i32
    %0 = arith.subi %c0_i32, %arg1 : i32
    %c0_i32_0 = arith.constant 0 : i32
    return %0, %arg0 : i32, i32
  }
  func.func @transform_3(%arg0: i32, %arg1: i32) -> (i32, i32) {
    %c0_i32 = arith.constant 0 : i32
    %0 = arith.subi %c0_i32, %arg1 : i32
    %c0_i32_0 = arith.constant 0 : i32
    return %0, %arg0 : i32, i32
  }
  func.func @transform_4(%arg0: i32, %arg1: i32) -> (i32, i32) {
    %c0_i32 = arith.constant 0 : i32
    %0 = arith.subi %c0_i32, %arg1 : i32
    %c0_i32_0 = arith.constant 0 : i32
    return %0, %arg0 : i32, i32
  }
  func.func @transform_5(%arg0: i32, %arg1: i32) -> (i32, i32) {
    %c0_i32 = arith.constant 0 : i32
    %0 = arith.subi %c0_i32, %arg1 : i32
    %c0_i32_0 = arith.constant 0 : i32
    return %0, %arg0 : i32, i32
  }
}

</mosaic_0001>

<llo_original>
// kernel: tpu_custom_call.1
$region0: #{tpu_custom_call.1}
  #allocation0 [shape = 'u32[]', space=smem, size = 0x4, offset = 0x4, fixed_abs, tag = 'smem constant byte address 0x4 - core index']
  #allocation1 [shape = 'u32[144,128]{1,0:T(1,128)}', space=vmem, size = 0x12000, scoped, tag = 'internal scratch']
  #allocation2 [shape = 'f32[1,128]{1,0:T(1,128)}', space=vmem, size = 0x200, scoped, tag = 'scratch operand']
  %s0 = inlined_call_operand.hbm [shape: f32[16,128], index: 0, kind: input, shape index: {}]
  %s1 = inlined_call_operand.hbm [shape: f32[16,128], index: 1, kind: input, shape index: {}]
  %s2 = inlined_call_operand.hbm [shape: f32[16,128], index: 2, kind: input, shape index: {}]
  %s3 = inlined_call_operand.hbm [shape: f32[16,128], index: 3, kind: input, shape index: {}]
  %s4 = inlined_call_operand.hbm [shape: f32[16,128], index: 4, kind: output, shape index: {0}]
  %s5 = inlined_call_operand.hbm [shape: f32[16,128], index: 5, kind: output, shape index: {1}]
  %6 = xla_tuple %s4, %s5
  %s7 = sld [smem:[#allocation0]]
  $region54: #{tpu_custom_call.1} parent=0
    _
  %s9 = ssub.s32 1, %s7
  %s10 = scalar_select 0, %s9, %s7
  $region1: #{tpu_custom_call.1} parent=0
    #allocation3 [shape = 'u8[8192]{0}', space=vmem, size = 0x2000, scoped, tag = 'input window, operand 0, single buffered']
    #allocation4 [shape = 's32[1]{0}', space=sflag, size = 0x4, scoped, tag = 'scoped memory for tpu_custom_call.1']
    #allocation5 [shape = 's32[1]{0}', space=sflag, size = 0x4, scoped, tag = 'scoped memory for tpu_custom_call.1']
    #allocation6 [shape = 'u8[8192]{0}', space=vmem, size = 0x2000, scoped, tag = 'input window, operand 1, single buffered']
    #allocation7 [shape = 's32[1]{0}', space=sflag, size = 0x4, scoped, tag = 'scoped memory for tpu_custom_call.1']
    #allocation8 [shape = 'u8[8192]{0}', space=vmem, size = 0x2000, scoped, tag = 'input window, operand 2, single buffered']
    #allocation9 [shape = 'u8[8192]{0}', space=vmem, size = 0x2000, scoped, tag = 'input window, operand 3, single buffered']
    #allocation10 [shape = 's32[1]{0}', space=sflag, size = 0x4, scoped, tag = 'scoped memory for tpu_custom_call.1']
    #allocation11 [shape = 'u8[8192]{0}', space=vmem, size = 0x2000, scoped, tag = 'output window, operand 0, single buffered']
    #allocation12 [shape = 'u8[8192]{0}', space=vmem, size = 0x2000, scoped, tag = 'output window, operand 1, single buffered']
    #allocation13 [shape = 's32[1]{0}', space=sflag, size = 0x4, scoped, tag = 'scoped memory for tpu_custom_call.1']
    %11 = vsyncpa [#allocation4], 0
    %12 = vsyncpa [#allocation7], 0
    %13 = vsyncpa [#allocation10], 0
    %14 = vsyncpa [#allocation5], 0
    %15 = vsyncpa [#allocation13], 0
    // Predicated region
    $region2: #{tpu_custom_call.1} parent=1 // pred_check
      _
    $region3: #{tpu_custom_call.1} parent=1 // pred_check_branch
      %17 = sbr.rel (0) target = $region5
    $region4: #{tpu_custom_call.1} parent=1 // pred_region
      %s18 = ssub.s32 0, 0
      %s19 = smul.u32 2, %s18
      %s21 = ssub.s32 256, 256
      %22 = vsyncadd [#allocation4], %s21
      %s23 = smul.addr %s19, 128
      %s24 = scalar_lea.hbm %s0, %s23
      %s25 = sshll.u32 [#allocation3], 4
      %s26 = int_to_ptr.vmem [resolvable:$true] %s25
      %31 = dma.hbm_to_vmem [thread:$0]  %s24, 256, %s26, [#allocation4], 128, 128, 8
    $region5: #{tpu_custom_call.1} parent=1 // pred_fallthru
      _
    // Predicated region
    $region6: #{tpu_custom_call.1} parent=1 // pred_check
      _
    $region7: #{tpu_custom_call.1} parent=1 // pred_check_branch
      %33 = sbr.rel (0) target = $region9
    $region8: #{tpu_custom_call.1} parent=1 // pred_region
      %s34 = ssub.s32 0, 0
      %s35 = smul.u32 2, %s34
      %s37 = ssub.s32 256, 256
      %38 = vsyncadd [#allocation7], %s37
      %s39 = smul.addr %s35, 128
      %s40 = scalar_lea.hbm %s1, %s39
      %s41 = sshll.u32 [#allocation6], 4
      %s42 = int_to_ptr.vmem [resolvable:$true] %s41
      %47 = dma.hbm_to_vmem [thread:$0]  %s40, 256, %s42, [#allocation7], 128, 128, 8
    $region9: #{tpu_custom_call.1} parent=1 // pred_fallthru
      _
    // Predicated region
    $region10: #{tpu_custom_call.1} parent=1 // pred_check
      _
    $region11: #{tpu_custom_call.1} parent=1 // pred_check_branch
      %49 = sbr.rel (0) target = $region13
    $region12: #{tpu_custom_call.1} parent=1 // pred_region
      %s50 = ssub.s32 0, 0
      %s51 = smul.u32 2, %s50
      %s53 = ssub.s32 256, 256
      %54 = vsyncadd [#allocation7], %s53
      %s55 = smul.addr %s51, 128
      %s56 = scalar_lea.hbm %s2, %s55
      %s57 = sshll.u32 [#allocation8], 4
      %s58 = int_to_ptr.vmem [resolvable:$true] %s57
      %63 = dma.hbm_to_vmem [thread:$0]  %s56, 256, %s58, [#allocation7], 128, 128, 8
    $region13: #{tpu_custom_call.1} parent=1 // pred_fallthru
      _
    // Predicated region
    $region14: #{tpu_custom_call.1} parent=1 // pred_check
      _
    $region15: #{tpu_custom_call.1} parent=1 // pred_check_branch
      %65 = sbr.rel (0) target = $region17
    $region16: #{tpu_custom_call.1} parent=1 // pred_region
      %s66 = ssub.s32 0, 0
      %s67 = smul.u32 2, %s66
      %s69 = ssub.s32 256, 256
      %70 = vsyncadd [#allocation10], %s69
      %s71 = smul.addr %s67, 128
      %s72 = scalar_lea.hbm %s3, %s71
      %s73 = sshll.u32 [#allocation9], 4
      %s74 = int_to_ptr.vmem [resolvable:$true] %s73
      %79 = dma.hbm_to_vmem [thread:$0]  %s72, 256, %s74, [#allocation10], 128, 128, 8
    $region17: #{tpu_custom_call.1} parent=1 // pred_fallthru
      _
    // Predicated region
    $region18: #{tpu_custom_call.1} parent=1 // pred_check
      _
    $region19: #{tpu_custom_call.1} parent=1 // pred_check_branch
      %81 = sbr.rel (0) target = $region21
    $region20: #{tpu_custom_call.1} parent=1 // pred_region
      %82 = dma.done [#allocation4], 256
    $region21: #{tpu_custom_call.1} parent=1 // pred_fallthru
      _
    // Predicated region
    $region22: #{tpu_custom_call.1} parent=1 // pred_check
      _
    $region23: #{tpu_custom_call.1} parent=1 // pred_check_branch
      %84 = sbr.rel (0) target = $region25
    $region24: #{tpu_custom_call.1} parent=1 // pred_region
      %85 = dma.done [#allocation7], 256
    $region25: #{tpu_custom_call.1} parent=1 // pred_fallthru
      _
    // Predicated region
    $region26: #{tpu_custom_call.1} parent=1 // pred_check
      _
    $region27: #{tpu_custom_call.1} parent=1 // pred_check_branch
      %87 = sbr.rel (0) target = $region29
    $region28: #{tpu_custom_call.1} parent=1 // pred_region
      %88 = dma.done [#allocation7], 256
    $region29: #{tpu_custom_call.1} parent=1 // pred_fallthru
      _
    // Predicated region
    $region30: #{tpu_custom_call.1} parent=1 // pred_check
      _
    $region31: #{tpu_custom_call.1} parent=1 // pred_check_branch
      %90 = sbr.rel (0) target = $region33
    $region32: #{tpu_custom_call.1} parent=1 // pred_region
      %91 = dma.done [#allocation10], 256
    $region33: #{tpu_custom_call.1} parent=1 // pred_fallthru
      _
    %s92 = ssub.s32 0, 0
    %s93 = smul.u32 2, %s92
    %s94 = ssub.s32 0, 0
    %s95 = smul.u32 2, %s94
    %s96 = ssub.s32 0, 0
    %s97 = smul.u32 2, %s96
    %s98 = ssub.s32 0, 0
    %s99 = smul.u32 2, %s98
    %s100 = ssub.s32 0, 0
    %s101 = smul.u32 2, %s100
    %s102 = ssub.s32 0, 0
    %s103 = smul.u32 2, %s102
    %p104 = scmp.eq.s32.totalorder 0, 0
    // Predicated region
    $region34: #{tpu_custom_call.1} parent=1 // pred_check
      %p105 = pneg %p104
    $region35: #{tpu_custom_call.1} parent=1 // pred_check_branch
      %107 = sbr.rel (%p105) target = $region37
    $region36: #{tpu_custom_call.1} parent=1 // pred_region
      %108 = vst [vmem:[#allocation2] sm:$0x1] 0.0
    $region37: #{tpu_custom_call.1} parent=1 // pred_fallthru
      _
    %v109 = vlaneseq
    %v110 = vshrl.u32 %v109, 7
    %v111 = vadd.s32 %v110, 1
    %vm112 = vcmp.lt.s32.totalorder %v111, 8
    %v113 = vadd.s32 %v110, 2
    %vm114 = vcmp.lt.s32.totalorder %v113, 8
    %v115 = vadd.s32 %v110, 4
    %vm116 = vcmp.lt.s32.totalorder %v115, 8
    %v117 = vld [vmem:[#allocation2] sm:$0x1]
    %s118 = scalar_lea.vmem [#allocation3], 8
    %v119 = vld [vmem:[%s118] sm:$0xff]
    %s120 = scalar_lea.vmem [#allocation8], 8
    %v121 = vld [vmem:[%s120] sm:$0xff]
    %s122 = scalar_lea.vmem [#allocation6], 8
    %v123 = vld [vmem:[%s122] sm:$0xff]
    %v124 = vmul.f32 %v123, 0.99
    %v125 = vadd.f32 %v121, %v124
    %v126 = vsub.f32 %v125, %v119
    %s127 = scalar_lea.vmem [#allocation9], 8
    %v128 = vld [vmem:[%s127] sm:$0xff]
    %v129 = vsub.f32 1.0, %v128
    %v130 = vmul.f32 %v129, 0.9405
    %v131 = vrot.slane %v130, 1
    %v132 = vsel %vm112, %v131, 1.0
    %v133 = vrot.slane %v126, 1
    %v134 = vsel %vm112, %v133, 0.0
    %v135 = vmul.f32 %v130, %v134
    %v136 = vadd.f32 %v126, %v135
    %v137 = vmul.f32 %v130, %v132
    %v138 = vrot.slane %v137, 2
    %v139 = vsel %vm114, %v138, 1.0
    %v140 = vrot.slane %v136, 2
    %v141 = vsel %vm114, %v140, 0.0
    %v142 = vmul.f32 %v137, %v141
    %v143 = vadd.f32 %v136, %v142
    %v144 = vmul.f32 %v137, %v139
    %v145 = vrot.slane %v144, 4
    %v146 = vsel %vm116, %v145, 1.0
    %v147 = vrot.slane %v143, 4
    %v148 = vsel %vm116, %v147, 0.0
    %v149 = vmul.f32 %v144, %v148
    %v150 = vadd.f32 %v143, %v149
    %v151 = vmul.f32 %v144, %v146
    %v152 = vmul.f32 %v151, %v117
    %v153 = vadd.f32 %v150, %v152
    %v155 = vlaneseq
    %v156 = vshrl.u32 %v155, 7
    %v157 = vsub.s32 0, %v156
    %v158 = vrot.slane %v117, %v157
    %v160 = vmul.f32 %v151, %v158
    %v161 = vadd.f32 %v150, %v160
    %s162 = scalar_lea.vmem [#allocation11], 8
    %163 = vst [vmem:[%s162] sm:$0xff] %v161
    %v164 = vadd.f32 %v161, %v119
    %s165 = scalar_lea.vmem [#allocation12], 8
    %166 = vst [vmem:[%s165] sm:$0xff] %v164
    %v167 = vld [vmem:[#allocation3] sm:$0xff]
    %v168 = vld [vmem:[#allocation8] sm:$0xff]
    %v169 = vld [vmem:[#allocation6] sm:$0xff]
    %v170 = vmul.f32 %v169, 0.99
    %v171 = vadd.f32 %v168, %v170
    %v172 = vsub.f32 %v171, %v167
    %v173 = vld [vmem:[#allocation9] sm:$0xff]
    %v174 = vsub.f32 1.0, %v173
    %v175 = vmul.f32 %v174, 0.9405
    %v176 = vrot.slane %v175, 1
    %v177 = vsel %vm112, %v176, 1.0
    %v178 = vrot.slane %v172, 1
    %v179 = vsel %vm112, %v178, 0.0
    %v180 = vmul.f32 %v175, %v179
    %v181 = vadd.f32 %v172, %v180
    %v182 = vmul.f32 %v175, %v177
    %v183 = vrot.slane %v182, 2
    %v184 = vsel %vm114, %v183, 1.0
    %v185 = vrot.slane %v181, 2
    %v186 = vsel %vm114, %v185, 0.0
    %v187 = vmul.f32 %v182, %v186
    %v188 = vadd.f32 %v181, %v187
    %v189 = vmul.f32 %v182, %v184
    %v190 = vrot.slane %v189, 4
    %v191 = vsel %vm116, %v190, 1.0
    %v192 = vrot.slane %v188, 4
    %v193 = vsel %vm116, %v192, 0.0
    %v194 = vmul.f32 %v189, %v193
    %v195 = vadd.f32 %v188, %v194
    %v196 = vmul.f32 %v189, %v191
    %v197 = vmul.f32 %v196, %v153
    %v198 = vadd.f32 %v195, %v197
    %v199 = vlaneseq
    %v200 = vshrl.u32 %v199, 7
    %v201 = vsub.s32 0, %v200
    %v202 = vrot.slane %v153, %v201
    %v203 = vmul.f32 %v196, %v202
    %v204 = vadd.f32 %v195, %v203
    %205 = vst [vmem:[#allocation11] sm:$0xff] %v204
    %v206 = vadd.f32 %v204, %v167
    %207 = vst [vmem:[#allocation12] sm:$0xff] %v206
    %208 = vst [vmem:[#allocation2] sm:$0x1] %v198
    // Predicated region
    $region38: #{tpu_custom_call.1} parent=1 // pred_check
      _
    $region39: #{tpu_custom_call.1} parent=1 // pred_check_branch
      %210 = sbr.rel (0) target = $region41
    $region40: #{tpu_custom_call.1} parent=1 // pred_region
      %s211 = ssub.s32 0, 0
      %s212 = smul.u32 2, %s211
      %s214 = ssub.s32 256, 256
      %215 = vsyncadd [#allocation5], %s214
      %s216 = smul.addr %s212, 128
      %s217 = scalar_lea.hbm %s4, %s216
      %s218 = sshll.u32 [#allocation11], 4
      %s219 = int_to_ptr.vmem [resolvable:$true] %s218
      %224 = dma.vmem_to_hbm [thread:$0]  %s219, 256, %s217, [#allocation5], 128, 128, 8
    $region41: #{tpu_custom_call.1} parent=1 // pred_fallthru
      _
    // Predicated region
    $region42: #{tpu_custom_call.1} parent=1 // pred_check
      _
    $region43: #{tpu_custom_call.1} parent=1 // pred_check_branch
      %226 = sbr.rel (0) target = $region45
    $region44: #{tpu_custom_call.1} parent=1 // pred_region
      %s227 = ssub.s32 0, 0
      %s228 = smul.u32 2, %s227
      %s230 = ssub.s32 256, 256
      %231 = vsyncadd [#allocation13], %s230
      %s232 = smul.addr %s228, 128
      %s233 = scalar_lea.hbm %s5, %s232
      %s234 = sshll.u32 [#allocation12], 4
      %s235 = int_to_ptr.vmem [resolvable:$true] %s234
      %240 = dma.vmem_to_hbm [thread:$0]  %s235, 256, %s233, [#allocation13], 128, 128, 8
    $region45: #{tpu_custom_call.1} parent=1 // pred_fallthru
      _
    // Predicated region
    $region46: #{tpu_custom_call.1} parent=1 // pred_check
      _
    $region47: #{tpu_custom_call.1} parent=1 // pred_check_branch
      %242 = sbr.rel (0) target = $region49
    $region48: #{tpu_custom_call.1} parent=1 // pred_region
      %243 = dma.done [#allocation5], 256
    $region49: #{tpu_custom_call.1} parent=1 // pred_fallthru
      _
    // Predicated region
    $region50: #{tpu_custom_call.1} parent=1 // pred_check
      _
    $region51: #{tpu_custom_call.1} parent=1 // pred_check_branch
      %245 = sbr.rel (0) target = $region53
    $region52: #{tpu_custom_call.1} parent=1 // pred_region
      %246 = dma.done [#allocation13], 256
    $region53: #{tpu_custom_call.1} parent=1 // pred_fallthru
      _
    %247 = vsyncpa [#allocation4], 1
    %248 = vsyncpa [#allocation7], 1
    %249 = vsyncpa [#allocation10], 1
    %250 = vsyncpa [#allocation5], 1
    %251 = vsyncpa [#allocation13], 1

</llo_original>
